<compile_context>
chip_gen: v7x
topology: tpu7x:2x2x1
jax: 0.10.0
libtpu: 0.0.40
codegen_flags: <defaults>
</compile_context>

<pallas_src>
import functools

import jax
import jax.numpy as jnp
from jax.experimental import pallas as pl
from jax.experimental.pallas import tpu as pltpu

EPS = 1e-5
_LANE = 128


def _cdiv(a, b):
    return -(-a // b)


def _round_up(a, m):
    return _cdiv(a, m) * m


def _vmem_working_set_budget():
    """Byte budget for the 4 live block buffers (in+out, double-buffered)."""
    phys = 64 << 20  # conservative default: v7x physical VMEM
    try:
        info = pltpu.get_tpu_info()
        phys = int(getattr(info, "vmem_capacity_bytes", phys)) or phys
    except Exception:
        pass
    # <= 1/4 of physical, and never more than ~24 MiB (v7x-safe), >= 8 MiB.
    return max(8 << 20, min(phys // 4, 24 << 20))


# ----------------------------------------------------------------------------
# Kernel (layout-agnostic: reduction is always over the leading axis)
# ----------------------------------------------------------------------------
def _layernorm_kernel(x_ref, g_ref, b_ref, o_ref, *, eps):
    """Channel LayerNorm on one block.

    Small-C layout : x_ref (1, C, s_tile, 128), g_ref/b_ref (C, 1, 1)
    Large-C layout : x_ref (1, C, tile),        g_ref/b_ref (C, 1)
    Reduction is over axis 0 of x_ref[0] (the channel axis) in both cases.
    """
    x = x_ref[0].astype(jnp.float32)                     # f32 accumulation
    mean = jnp.mean(x, axis=0, keepdims=True)
    cent = x - mean
    var = jnp.mean(cent * cent, axis=0, keepdims=True)   # unbiased=False
    inv = jax.lax.rsqrt(var + eps)                       # EUP slot (free)
    o_ref[0] = (cent * inv * g_ref[...] + b_ref[...]).astype(o_ref.dtype)


# ----------------------------------------------------------------------------
# Wrapper
# ----------------------------------------------------------------------------
def layer_norm_forward(x_nchw, g, b, eps=EPS):
    """Pallas equivalent of LayerNorm.forward(x) for NCHW input."""
    B, C, H, W = x_nchw.shape
    HW = H * W
    itemsize = jnp.dtype(x_nchw.dtype).itemsize
    budget = _vmem_working_set_budget()

    if C < 8:
        # ---- small C: spatial on sublanes, fully dense vregs ----------------
        S1 = _cdiv(HW, _LANE)                       # sublane rows after lane pad
        row_bytes = 4 * C * _LANE * itemsize        # 4 live buffers per row
        s_max = max(1, budget // row_bytes)
        if S1 <= s_max:
            s_tile, n_sp = S1, 1
            if B == 1 and S1 >= 16:                 # keep 2 parallel steps (v7x)
                s_tile, n_sp = _round_up(_cdiv(S1, 2), 8), 2
        else:
            s_tile = max(8, (s_max // 8) * 8)       # sublane-aligned tile
            n_sp = _cdiv(S1, s_tile)
        S = s_tile * n_sp
        HW_pad = S * _LANE
        block_bytes = C * _round_up(s_tile, 8) * _LANE * itemsize
        block = (1, C, s_tile, _LANE)
        xshape = (B, C, S, _LANE)
        gshape = (C, 1, 1)
        x_map = lambda i, j: (i, 0, j, 0)
        g_map = lambda i, j: (0, 0, 0)
    else:
        # ---- C >= 8: channels on sublanes, lane-dense spatial tile ----------
        Cp = _round_up(C, 8)
        col_bytes = 4 * Cp * _LANE * itemsize       # 4 live buffers per 128 lanes
        u_max = max(1, budget // col_bytes)
        U1 = _cdiv(HW, _LANE)
        if U1 <= u_max:
            u_tile, n_sp = U1, 1
            if B == 1 and U1 >= 2:                  # keep 2 parallel steps (v7x)
                u_tile, n_sp = _cdiv(U1, 2), 2
        else:
            u_tile = u_max
            n_sp = _cdiv(U1, u_tile)
        tile = u_tile * _LANE
        HW_pad = tile * n_sp
        block_bytes = Cp * tile * itemsize
        block = (1, C, tile)
        xshape = (B, C, HW_pad)
        gshape = (C, 1)
        x_map = lambda i, j: (i, 0, j)
        g_map = lambda i, j: (0, 0)

    # Pad the spatial extent once so every block is lane-dense; the padded
    # columns never influence valid outputs (reduction is over C only) and
    # are sliced off below.
    x2 = x_nchw.reshape(B, C, HW)
    if HW_pad != HW:
        x2 = jnp.pad(x2, ((0, 0), (0, 0), (0, HW_pad - HW)))
    x2 = x2.reshape(xshape)
    g2 = g.reshape(gshape).astype(jnp.float32)
    b2 = b.reshape(gshape).astype(jnp.float32)

    # Explicit scoped-VMEM limit sized to the chosen tile (with headroom),
    # capped below v7x's 64 MiB physical VMEM.
    working = 4 * block_bytes
    vmem_limit = int(min(48 << 20, max(32 << 20, working * 3 // 2 + (1 << 20))))

    out = pl.pallas_call(
        functools.partial(_layernorm_kernel, eps=eps),
        out_shape=jax.ShapeDtypeStruct(xshape, x_nchw.dtype),
        grid=(B, n_sp),
        in_specs=[
            pl.BlockSpec(block, x_map),
            pl.BlockSpec(gshape, g_map),
            pl.BlockSpec(gshape, g_map),
        ],
        out_specs=pl.BlockSpec(block, x_map),
        compiler_params=pltpu.CompilerParams(
            dimension_semantics=("parallel", "parallel"),
            vmem_limit_bytes=vmem_limit,
        ),
    )(x2, g2, b2)

    out = out.reshape(B, C, HW_pad)
    if HW_pad != HW:
        out = out[..., :HW]
    return out.reshape(B, C, H, W)


# ----------------------------------------------------------------------------
# Pure-JAX reference (matches the PyTorch module)
# ----------------------------------------------------------------------------
def layer_norm_ref(x, g, b, eps=EPS):
    mean = jnp.mean(x, axis=1, keepdims=True)
    var = jnp.mean((x - mean) ** 2, axis=1, keepdims=True)   # unbiased=False
    return (x - mean) / jnp.sqrt(var + eps) * g + b


# ----------------------------------------------------------------------------
# Main
# ----------------------------------------------------------------------------
if __name__ == "__main__":
    key = jax.random.PRNGKey(0)
    kx, kg, kb = jax.random.split(key, 3)

    # Primary shape implied by the module (NCHW, per-channel affine).
    B, C, H, W = 2, 4, 16, 16
    x = jax.random.normal(kx, (B, C, H, W), jnp.float32)
    g = 1.0 + 0.1 * jax.random.normal(kg, (1, C, 1, 1), jnp.float32)
    b = 0.1 * jax.random.normal(kb, (1, C, 1, 1), jnp.float32)

    out = jax.block_until_ready(layer_norm_forward(x, g, b))
    ref = layer_norm_ref(x, g, b)
    assert out.shape == (B, C, H, W)
    assert jnp.allclose(out, ref, atol=1e-4, rtol=1e-4), "mismatch vs reference"

    # Tiny secondary checks: the C>=8 (channel-on-sublane) path and a
    # non-128-multiple spatial extent (exercises the lane-padding path).
    for (B2, C2, H2, W2) in [(1, 16, 8, 8), (2, 3, 5, 7)]:
        k1, k2, k3, kx = jax.random.split(kx, 4)
        x2 = jax.random.normal(k1, (B2, C2, H2, W2), jnp.float32)
        g2 = 1.0 + 0.1 * jax.random.normal(k2, (1, C2, 1, 1), jnp.float32)
        b2 = 0.1 * jax.random.normal(k3, (1, C2, 1, 1), jnp.float32)
        o2 = jax.block_until_ready(layer_norm_forward(x2, g2, b2))
        r2 = layer_norm_ref(x2, g2, b2)
        assert jnp.allclose(o2, r2, atol=1e-4, rtol=1e-4), "mismatch vs reference"

    print("KERNEL_OK")
</pallas_src>

<mosaic_0001>
module attributes {stable_mosaic.version = 11 : i64} {
  func.func @_layernorm_kernel(%arg0: i32, %arg1: i32, %arg2: memref<1x4x2x128xf32, #tpu.memory_space<vmem>>, %arg3: memref<4x1x1xf32, #tpu.memory_space<vmem>>, %arg4: memref<4x1x1xf32, #tpu.memory_space<vmem>>, %arg5: memref<1x4x2x128xf32, #tpu.memory_space<vmem>>) attributes {dimension_semantics = [#tpu.dimension_semantics<parallel>, #tpu.dimension_semantics<parallel>], iteration_bounds = array<i64: 2, 1>, scalar_prefetch = 0 : i64, scratch_operands = 0 : i64, tpu.core_type = #tpu.core_type<tc>, window_params = [{transform_indices = @transform_0, window_bounds = array<i64: 1, 4, 2, 128>}, {pipeline_mode = #tpu.pipeline_mode<synchronous>, transform_indices = @transform_1, window_bounds = array<i64: 4, 1, 1>}, {pipeline_mode = #tpu.pipeline_mode<synchronous>, transform_indices = @transform_2, window_bounds = array<i64: 4, 1, 1>}, {transform_indices = @transform_3, window_bounds = array<i64: 1, 4, 2, 128>}]} {
    %c0 = arith.constant 0 : index
    %c0_0 = arith.constant 0 : index
    %c0_1 = arith.constant 0 : index
    %c0_2 = arith.constant 0 : index
    %0 = vector.load %arg2[%c0, %c0_0, %c0_1, %c0_2] : memref<1x4x2x128xf32, #tpu.memory_space<vmem>>, vector<1x4x2x128xf32>
    %1 = vector.shape_cast %0 : vector<1x4x2x128xf32> to vector<4x2x128xf32>
    %cst = arith.constant dense<0.000000e+00> : vector<2x128xf32>
    %2 = vector.multi_reduction <add>, %1, %cst [0] : vector<4x2x128xf32> to vector<2x128xf32>
    %3 = vector.shape_cast %2 : vector<2x128xf32> to vector<1x2x128xf32>
    %cst_3 = arith.constant 4.000000e+00 : f32
    %4 = vector.broadcast %cst_3 : f32 to vector<1x2x128xf32>
    %5 = arith.divf %3, %4 : vector<1x2x128xf32>
    %6 = vector.broadcast %5 : vector<1x2x128xf32> to vector<4x2x128xf32>
    %7 = arith.subf %1, %6 : vector<4x2x128xf32>
    %8 = arith.mulf %7, %7 : vector<4x2x128xf32>
    %cst_4 = arith.constant dense<0.000000e+00> : vector<2x128xf32>
    %9 = vector.multi_reduction <add>, %8, %cst_4 [0] : vector<4x2x128xf32> to vector<2x128xf32>
    %10 = vector.shape_cast %9 : vector<2x128xf32> to vector<1x2x128xf32>
    %cst_5 = arith.constant 4.000000e+00 : f32
    %11 = vector.broadcast %cst_5 : f32 to vector<1x2x128xf32>
    %12 = arith.divf %10, %11 : vector<1x2x128xf32>
    %cst_6 = arith.constant 9.99999974E-6 : f32
    %13 = vector.broadcast %cst_6 : f32 to vector<1x2x128xf32>
    %14 = arith.addf %12, %13 : vector<1x2x128xf32>
    %15 = math.rsqrt %14 : vector<1x2x128xf32>
    %16 = vector.broadcast %15 : vector<1x2x128xf32> to vector<4x2x128xf32>
    %17 = arith.mulf %7, %16 : vector<4x2x128xf32>
    %c0_7 = arith.constant 0 : index
    %c0_8 = arith.constant 0 : index
    %c0_9 = arith.constant 0 : index
    %18 = vector.load %arg3[%c0_7, %c0_8, %c0_9] : memref<4x1x1xf32, #tpu.memory_space<vmem>>, vector<4x1x1xf32>
    %19 = vector.broadcast %18 : vector<4x1x1xf32> to vector<4x2x128xf32>
    %20 = arith.mulf %17, %19 : vector<4x2x128xf32>
    %c0_10 = arith.constant 0 : index
    %c0_11 = arith.constant 0 : index
    %c0_12 = arith.constant 0 : index
    %21 = vector.load %arg4[%c0_10, %c0_11, %c0_12] : memref<4x1x1xf32, #tpu.memory_space<vmem>>, vector<4x1x1xf32>
    %22 = vector.broadcast %21 : vector<4x1x1xf32> to vector<4x2x128xf32>
    %23 = arith.addf %20, %22 : vector<4x2x128xf32>
    %c0_13 = arith.constant 0 : index
    %c0_14 = arith.constant 0 : index
    %c0_15 = arith.constant 0 : index
    %c0_16 = arith.constant 0 : index
    %24 = vector.load %arg5[%c0_13, %c0_14, %c0_15, %c0_16] : memref<1x4x2x128xf32, #tpu.memory_space<vmem>>, vector<1x4x2x128xf32>
    %25 = vector.shape_cast %24 : vector<1x4x2x128xf32> to vector<4x2x128xf32>
    %26 = vector.shape_cast %23 : vector<4x2x128xf32> to vector<1x4x2x128xf32>
    tpu.vector_store %arg5[%c0_13, %c0_14, %c0_15, %c0_16], %26 {strides = array<i32>} : memref<1x4x2x128xf32, #tpu.memory_space<vmem>>, vector<1x4x2x128xf32>,
    return
  }
  func.func @transform_0(%arg0: i32, %arg1: i32) -> (i32, i32, i32, i32) {
    %c0_i32 = arith.constant 0 : i32
    %c0_i32_0 = arith.constant 0 : i32
    %c0_i32_1 = arith.constant 0 : i32
    return %arg0, %c0_i32, %arg1, %c0_i32_0 : i32, i32, i32, i32
  }
  func.func @transform_1(%arg0: i32, %arg1: i32) -> (i32, i32, i32) {
    %c0_i32 = arith.constant 0 : i32
    %c0_i32_0 = arith.constant 0 : i32
    %c0_i32_1 = arith.constant 0 : i32
    %c0_i32_2 = arith.constant 0 : i32
    return %c0_i32, %c0_i32_0, %c0_i32_1 : i32, i32, i32
  }
  func.func @transform_2(%arg0: i32, %arg1: i32) -> (i32, i32, i32) {
    %c0_i32 = arith.constant 0 : i32
    %c0_i32_0 = arith.constant 0 : i32
    %c0_i32_1 = arith.constant 0 : i32
    %c0_i32_2 = arith.constant 0 : i32
    return %c0_i32, %c0_i32_0, %c0_i32_1 : i32, i32, i32
  }
  func.func @transform_3(%arg0: i32, %arg1: i32) -> (i32, i32, i32, i32) {
    %c0_i32 = arith.constant 0 : i32
    %c0_i32_0 = arith.constant 0 : i32
    %c0_i32_1 = arith.constant 0 : i32
    return %arg0, %c0_i32, %arg1, %c0_i32_0 : i32, i32, i32, i32
  }
}

</mosaic_0001>

<llo_original>
// kernel: tpu_custom_call.1
$region0: #{tpu_custom_call.1}
  #allocation0 [shape = 'u32[]', space=smem, size = 0x4, offset = 0x4, fixed_abs, tag = 'smem constant byte address 0x4 - core index']
  #allocation1 [shape = 'u32[144,128]{1,0:T(1,128)}', space=vmem, size = 0x12000, scoped, tag = 'internal scratch']
  %s0 = inlined_call_operand.hbm [shape: f32[2,4,2,128], index: 0, kind: input, shape index: {}]
  %s1 = inlined_call_operand.vmem [shape: f32[4,1,1], index: 1, kind: input, shape index: {}]
  %s2 = inlined_call_operand.vmem [shape: f32[4,1,1], index: 2, kind: input, shape index: {}]
  %s3 = inlined_call_operand.hbm [shape: f32[2,4,2,128], index: 3, kind: output, shape index: {}]
  %s4 = sld [smem:[#allocation0]]
  $region49: #{tpu_custom_call.1} parent=0
    _
  %s6 = ssub.s32 1, %s4
  %s7 = scalar_select 0, %s6, %s4
  $region1: #{tpu_custom_call.1} parent=0
    #allocation2 [shape = 'u8[8192]{0}', space=vmem, size = 0x2000, scoped, tag = 'input window, operand 0']
    #allocation3 [shape = 's32[2]{0}', space=sflag, size = 0x8, scoped, tag = 'scoped memory for tpu_custom_call.1']
    #allocation4 [shape = 's32[2]{0}', space=sflag, size = 0x8, scoped, tag = 'scoped memory for tpu_custom_call.1']
    #allocation5 [shape = 'u8[8192]{0}', space=vmem, size = 0x2000, scoped, tag = 'output window, operand 0']
    %8 = vsyncpa [#allocation3], 0
    %s9 = scalar_lea.sflag [#allocation3], 1
    %10 = vsyncpa %s9, 0
    %11 = vsyncpa [#allocation4], 0
    %s12 = scalar_lea.sflag [#allocation4], 1
    %13 = vsyncpa %s12, 0
    loop: start=0, step=1, limit=4
    $region2: #{tpu_custom_call.1} parent=1 // loop_pre_header
      _
    $region3: #{tpu_custom_call.1} parent=1 // loop_header
      %s15 = sphi 0, %s19
      %p16 = scmp.ge.s32.totalorder %s15, 4
      %s22 = sphi 0, %s34
      %s23 = sphi 0, %s30
      %s24 = sphi 0, %s22
      %s25 = sphi 0, %s23
      %s26 = sphi 0, %s24
      %s27 = sphi 0, %s25
      %s39 = sphi 0, %s41
      %s42 = sphi 0, %s39
      %s43 = sphi 0, %s42
      %s59 = sphi 0, %s43
      %s63 = sphi 0, %s63
      %s65 = sphi 0, %s63
      %s66 = sphi 0, %s65
      %s80 = sphi 0, %s66
      %s84 = sphi 0, %s84
      %s86 = sphi 0, %s84
      %s87 = sphi 0, %s86
      %s101 = sphi 0, %s87
      %s109 = sphi 0, %s111
      %s112 = sphi 0, %s109
      %s113 = sphi 0, %s112
      %s129 = sphi 0, %s113
    $region4: #{tpu_custom_call.1} parent=1 // loop_header_branch
      %18 = sbr.rel (%p16) target = $region8
    $region5: #{tpu_custom_call.1} parent=1 // loop_body
      %s20 = ssub.s32 %s15, 1
      %s21 = ssub.s32 %s15, 2
      %s28 = sadd.s32 1, %s23
      %p29 = scmp.ge.s32.totalorder %s28, 1
      %s30 = scalar_select %p29, 0, %s28
      %s31 = sadd.s32 1, %s22
      %s32 = scalar_select %p29, %s31, %s22
      %p33 = scmp.ge.s32.totalorder %s32, 2
      %s34 = scalar_select %p33, 0, %s32
      %s35 = ssub.s32 %s22, %s34
      %s36 = ssub.s32 %s23, %s30
      %s37 = sor.u32 %s35, %s36
      %p38 = scmp.eq.s32.totalorder %s37, 0
      %s40 = sadd.s32 %s39, 1
      %s41 = scalar_select %p38, %s39, %s40
      %p44 = pneg %p38
      %p45 = scmp.eq.s32.totalorder %s15, 1
      %p46 = por %p44, %p45
      %p47 = scmp.ne.s32.totalorder %s39, %s42
      %p48 = scmp.eq.s32.totalorder %s15, 0
      %p49 = por %p47, %p48
      %p50 = scmp.ne.s32.totalorder %s39, %s42
      %p51 = scmp.eq.s32.totalorder %s20, 1
      %p52 = por %p50, %p51
      %p53 = scmp.ne.s32.totalorder %s42, %s43
      %p54 = scmp.eq.s32.totalorder %s20, 0
      %p55 = por %p53, %p54
      %p56 = scmp.ne.s32.totalorder %s42, %s43
      %p57 = scmp.eq.s32.totalorder %s21, 1
      %p58 = por %p56, %p57
      %p60 = scmp.ne.s32.totalorder %s43, %s59
      %p61 = scmp.eq.s32.totalorder %s21, 0
      %p62 = por %p60, %p61
      %s64 = sadd.s32 %s63, 1
      %p67 = scmp.eq.s32.totalorder %s15, 1
      %p68 = scmp.ne.s32.totalorder %s63, %s65
      %p69 = scmp.eq.s32.totalorder %s15, 0
      %p70 = por %p68, %p69
      %p71 = scmp.ne.s32.totalorder %s63, %s65
      %p72 = scmp.eq.s32.totalorder %s20, 1
      %p73 = por %p71, %p72
      %p74 = scmp.ne.s32.totalorder %s65, %s66
      %p75 = scmp.eq.s32.totalorder %s20, 0
      %p76 = por %p74, %p75
      %p77 = scmp.ne.s32.totalorder %s65, %s66
      %p78 = scmp.eq.s32.totalorder %s21, 1
      %p79 = por %p77, %p78
      %p81 = scmp.ne.s32.totalorder %s66, %s80
      %p82 = scmp.eq.s32.totalorder %s21, 0
      %p83 = por %p81, %p82
      %s85 = sadd.s32 %s84, 1
      %p88 = scmp.eq.s32.totalorder %s15, 1
      %p89 = scmp.ne.s32.totalorder %s84, %s86
      %p90 = scmp.eq.s32.totalorder %s15, 0
      %p91 = por %p89, %p90
      %p92 = scmp.ne.s32.totalorder %s84, %s86
      %p93 = scmp.eq.s32.totalorder %s20, 1
      %p94 = por %p92, %p93
      %p95 = scmp.ne.s32.totalorder %s86, %s87
      %p96 = scmp.eq.s32.totalorder %s20, 0
      %p97 = por %p95, %p96
      %p98 = scmp.ne.s32.totalorder %s86, %s87
      %p99 = scmp.eq.s32.totalorder %s21, 1
      %p100 = por %p98, %p99
      %p102 = scmp.ne.s32.totalorder %s87, %s101
      %p103 = scmp.eq.s32.totalorder %s21, 0
      %p104 = por %p102, %p103
      %s105 = ssub.s32 %s22, %s34
      %s106 = ssub.s32 %s23, %s30
      %s107 = sor.u32 %s105, %s106
      %p108 = scmp.eq.s32.totalorder %s107, 0
      %s110 = sadd.s32 %s109, 1
      %s111 = scalar_select %p108, %s109, %s110
      %p114 = pneg %p108
      %p115 = scmp.eq.s32.totalorder %s15, 1
      %p116 = por %p114, %p115
      %p117 = scmp.ne.s32.totalorder %s109, %s112
      %p118 = scmp.eq.s32.totalorder %s15, 0
      %p119 = por %p117, %p118
      %p120 = scmp.ne.s32.totalorder %s109, %s112
      %p121 = scmp.eq.s32.totalorder %s20, 1
      %p122 = por %p120, %p121
      %p123 = scmp.ne.s32.totalorder %s112, %s113
      %p124 = scmp.eq.s32.totalorder %s20, 0
      %p125 = por %p123, %p124
      %p126 = scmp.ne.s32.totalorder %s112, %s113
      %p127 = scmp.eq.s32.totalorder %s21, 1
      %p128 = por %p126, %p127
      %p130 = scmp.ne.s32.totalorder %s113, %s129
      %p131 = scmp.eq.s32.totalorder %s21, 0
      %p132 = por %p130, %p131
      %p133 = scmp.le.s32.totalorder 1, %s15
      %p134 = scmp.lt.s32.totalorder %s15, 3
      %p135 = pnand %p133, %p134
      %p136 = pneg %p135
      // Predicated region
      $region9: #{tpu_custom_call.1} parent=5 // pred_check
        _
      $region10: #{tpu_custom_call.1} parent=5 // pred_check_branch
        %138 = sbr.rel (%p135) target = $region12
      $region11: #{tpu_custom_call.1} parent=5 // pred_region
        %s139 = ssub.s32 %s15, 1
        // Predicated region
        $region13: #{tpu_custom_call.1} parent=11 // pred_check
          %p140 = pneg %p76
        $region14: #{tpu_custom_call.1} parent=11 // pred_check_branch
          %142 = sbr.rel (%p140) target = $region16
        $region15: #{tpu_custom_call.1} parent=11 // pred_region
          _
        $region16: #{tpu_custom_call.1} parent=11 // pred_fallthru
          _
        // Predicated region
        $region17: #{tpu_custom_call.1} parent=11 // pred_check
          %p143 = pneg %p97
        $region18: #{tpu_custom_call.1} parent=11 // pred_check_branch
          %145 = sbr.rel (%p143) target = $region20
        $region19: #{tpu_custom_call.1} parent=11 // pred_region
          _
        $region20: #{tpu_custom_call.1} parent=11 // pred_fallthru
          _
      $region12: #{tpu_custom_call.1} parent=5 // pred_fallthru
        _
      %p146 = scmp.lt.s32.totalorder %s15, 2
      // Predicated region
      $region21: #{tpu_custom_call.1} parent=5 // pred_check
        %p147 = pneg %p146
      $region22: #{tpu_custom_call.1} parent=5 // pred_check_branch
        %149 = sbr.rel (%p147) target = $region24
      $region23: #{tpu_custom_call.1} parent=5 // pred_region
        // Predicated region
        $region25: #{tpu_custom_call.1} parent=23 // pred_check
          %p150 = pneg %p49
        $region26: #{tpu_custom_call.1} parent=23 // pred_check_branch
          %152 = sbr.rel (%p150) target = $region28
        $region27: #{tpu_custom_call.1} parent=23 // pred_region
          %s153 = sand.u32 %s39, 1
          %s154 = scalar_lea.sflag [#allocation3], %s153
          %s155 = sand.u32 %s39, 1
          %s156 = smul.addr %s155, 8
          %s157 = scalar_lea.vmem [#allocation2], %s156
          %s159 = ssub.s32 128, 128
          %160 = vsyncadd %s154, %s159
          %s161 = smul.addr %s22, 4
          %s162 = sadd.s32 %s23, %s161
          %s163 = smul.addr %s162, 32
          %s164 = scalar_lea.hbm %s0, %s163
          %s165 = sshll.u32 %s157, 4
          %s166 = int_to_ptr.vmem [resolvable:$true] %s165
          %171 = dma.hbm_to_vmem [thread:$0]  %s164, 128, %s166, %s154, 32, 32, 2
        $region28: #{tpu_custom_call.1} parent=23 // pred_fallthru
          _
      $region24: #{tpu_custom_call.1} parent=5 // pred_fallthru
        _
      %p172 = scmp.le.s32.totalorder 1, %s15
      %p173 = scmp.lt.s32.totalorder %s15, 3
      %p174 = pnand %p172, %p173
      %p175 = pneg %p174
      // Predicated region
      $region29: #{tpu_custom_call.1} parent=5 // pred_check
        _
      $region30: #{tpu_custom_call.1} parent=5 // pred_check_branch
        %177 = sbr.rel (%p174) target = $region32
      $region31: #{tpu_custom_call.1} parent=5 // pred_region
        %s178 = ssub.s32 %s15, 1
        %s179 = sand.u32 %s42, 1
        %s180 = scalar_lea.sflag [#allocation3], %s179
        %s181 = sand.u32 %s42, 1
        %s182 = smul.addr %s181, 8
        %s183 = scalar_lea.vmem [#allocation2], %s182
        // Predicated region
        $region33: #{tpu_custom_call.1} parent=31 // pred_check
          %p184 = pneg %p55
        $region34: #{tpu_custom_call.1} parent=31 // pred_check_branch
          %186 = sbr.rel (%p184) target = $region36
        $region35: #{tpu_custom_call.1} parent=31 // pred_region
          %187 = dma.done %s180, 128
        $region36: #{tpu_custom_call.1} parent=31 // pred_fallthru
          _
        %s188 = sand.u32 %s42, 1
        %s189 = scalar_lea.sflag [#allocation3], %s188
        %s190 = sand.u32 %s42, 1
        %s191 = smul.addr %s190, 8
        %s192 = scalar_lea.vmem [#allocation2], %s191
        %p193 = pneg %p55
        %p194 = pneg %p52
        %p195 = pneg %p76
        %p196 = pneg %p73
        %p197 = pneg %p97
        %p198 = pneg %p94
        %p199 = pneg %p125
        %p200 = pneg %p122
        %s201 = sand.u32 %s112, 1
        %s202 = scalar_lea.sflag [#allocation4], %s201
        %s203 = sand.u32 %s112, 1
        %s204 = smul.addr %s203, 8
        %s205 = scalar_lea.vmem [#allocation5], %s204
        %v206 = vld [vmem:[%s183] sm:$0x3]
        %v207 = vld [vmem:[%s183 + $0x2] sm:$0x3]
        %v208 = vld [vmem:[%s183 + $0x4] sm:$0x3]
        %v209 = vld [vmem:[%s183 + $0x6] sm:$0x3]
        %vm210 = vcmask 1041408
        %v211 = vsel %vm210, %v206, 0.0
        %v212 = vsel %vm210, %v207, 0.0
        %v213 = vadd.f32 %v211, %v212
        %v214 = vsel %vm210, %v208, 0.0
        %v215 = vadd.f32 %v213, %v214
        %v216 = vsel %vm210, %v209, 0.0
        %v217 = vadd.f32 %v215, %v216
        %v218 = vrcp.pop 4.0
        %v219 = vmul.f32 %v217, %v218
        %v220 = vsub.f32 %v206, %v219
        %v221 = vsub.f32 %v207, %v219
        %v222 = vsub.f32 %v208, %v219
        %v223 = vsub.f32 %v209, %v219
        %v224 = vmul.f32 %v220, %v220
        %v225 = vmul.f32 %v221, %v221
        %v226 = vmul.f32 %v222, %v222
        %v227 = vmul.f32 %v223, %v223
        %v228 = vsel %vm210, %v224, 0.0
        %v229 = vsel %vm210, %v225, 0.0
        %v230 = vadd.f32 %v228, %v229
        %v231 = vsel %vm210, %v226, 0.0
        %v232 = vadd.f32 %v230, %v231
        %v233 = vsel %vm210, %v227, 0.0
        %v234 = vadd.f32 %v232, %v233
        %v235 = vmul.f32 %v234, %v218
        %v236 = vadd.f32 %v235, 1e-05
        %v237 = vrsqrt.pop %v236
        %v238 = vmul.f32 %v220, %v237
        %v239 = vmul.f32 %v221, %v237
        %v240 = vmul.f32 %v222, %v237
        %v241 = vmul.f32 %v223, %v237
        %v242 = vld [vmem:[%s1] sm:$0x1]
        %v243 = vld [vmem:[%s1 + $0x1] sm:$0x1]
        %v244 = vld [vmem:[%s1 + $0x2] sm:$0x1]
        %v245 = vld [vmem:[%s1 + $0x3] sm:$0x1]
        %v250 = vlaneseq
        %v251 = vshrl.u32 %v250, 7
        %v252 = vsub.s32 0, %v251
        %v253 = vrot.slane %v242, %v252
        %v254 = vlaneseq
        %v255 = vshrl.u32 %v254, 7
        %v256 = vsub.s32 0, %v255
        %v257 = vrot.slane %v243, %v256
        %v258 = vlaneseq
        %v259 = vshrl.u32 %v258, 7
        %v260 = vsub.s32 0, %v259
        %v261 = vrot.slane %v244, %v260
        %v262 = vlaneseq
        %v263 = vshrl.u32 %v262, 7
        %v264 = vsub.s32 0, %v263
        %v265 = vrot.slane %v245, %v264
        %266 = vset.pattern.permute.xlu0 0
        %267 = vperm.xlu0 %266, %v253
        %v268 = vpop.permute.xlu0 %267
        %270 = vset.pattern.permute.xlu0 0
        %271 = vperm.xlu0 %270, %v257
        %v272 = vpop.permute.xlu0 %271
        %274 = vset.pattern.permute.xlu0 0
        %275 = vperm.xlu0 %274, %v261
        %v276 = vpop.permute.xlu0 %275
        %278 = vset.pattern.permute.xlu0 0
        %279 = vperm.xlu0 %278, %v265
        %v280 = vpop.permute.xlu0 %279
        %v282 = vmul.f32 %v238, %v268
        %v283 = vmul.f32 %v239, %v272
        %v284 = vmul.f32 %v240, %v276
        %v285 = vmul.f32 %v241, %v280
        %v286 = vld [vmem:[%s2] sm:$0x1]
        %v287 = vld [vmem:[%s2 + $0x1] sm:$0x1]
        %v288 = vld [vmem:[%s2 + $0x2] sm:$0x1]
        %v289 = vld [vmem:[%s2 + $0x3] sm:$0x1]
        %v294 = vlaneseq
        %v295 = vshrl.u32 %v294, 7
        %v296 = vsub.s32 0, %v295
        %v297 = vrot.slane %v286, %v296
        %v298 = vlaneseq
        %v299 = vshrl.u32 %v298, 7
        %v300 = vsub.s32 0, %v299
        %v301 = vrot.slane %v287, %v300
        %v302 = vlaneseq
        %v303 = vshrl.u32 %v302, 7
        %v304 = vsub.s32 0, %v303
        %v305 = vrot.slane %v288, %v304
        %v306 = vlaneseq
        %v307 = vshrl.u32 %v306, 7
        %v308 = vsub.s32 0, %v307
        %v309 = vrot.slane %v289, %v308
        %310 = vset.pattern.permute.xlu0 0
        %311 = vperm.xlu0 %310, %v297
        %v312 = vpop.permute.xlu0 %311
        %314 = vset.pattern.permute.xlu0 0
        %315 = vperm.xlu0 %314, %v301
        %v316 = vpop.permute.xlu0 %315
        %318 = vset.pattern.permute.xlu0 0
        %319 = vperm.xlu0 %318, %v305
        %v320 = vpop.permute.xlu0 %319
        %322 = vset.pattern.permute.xlu0 0
        %323 = vperm.xlu0 %322, %v309
        %v324 = vpop.permute.xlu0 %323
        %v326 = vadd.f32 %v282, %v312
        %v327 = vadd.f32 %v283, %v316
        %v328 = vadd.f32 %v284, %v320
        %v329 = vadd.f32 %v285, %v324
        %330 = vst [vmem:[%s205] sm:$0x3] %v326
        %331 = vst [vmem:[%s205 + $0x2] sm:$0x3] %v327
        %332 = vst [vmem:[%s205 + $0x4] sm:$0x3] %v328
        %333 = vst [vmem:[%s205 + $0x6] sm:$0x3] %v329
        %s334 = sand.u32 %s112, 1
        %s335 = scalar_lea.sflag [#allocation4], %s334
        %s336 = sand.u32 %s112, 1
        %s337 = smul.addr %s336, 8
        %s338 = scalar_lea.vmem [#allocation5], %s337
        // Predicated region
        $region37: #{tpu_custom_call.1} parent=31 // pred_check
          %p339 = pneg %p122
        $region38: #{tpu_custom_call.1} parent=31 // pred_check_branch
          %341 = sbr.rel (%p339) target = $region40
        $region39: #{tpu_custom_call.1} parent=31 // pred_region
          %s343 = ssub.s32 128, 128
          %344 = vsyncadd %s335, %s343
          %s345 = smul.addr %s24, 4
          %s346 = sadd.s32 %s25, %s345
          %s347 = smul.addr %s346, 32
          %s348 = scalar_lea.hbm %s3, %s347
          %s349 = sshll.u32 %s338, 4
          %s350 = int_to_ptr.vmem [resolvable:$true] %s349
          %355 = dma.vmem_to_hbm [thread:$0]  %s350, 128, %s348, %s335, 32, 32, 2
        $region40: #{tpu_custom_call.1} parent=31 // pred_fallthru
          _
      $region32: #{tpu_custom_call.1} parent=5 // pred_fallthru
        _
      %p356 = scmp.le.s32.totalorder 2, %s15
      // Predicated region
      $region41: #{tpu_custom_call.1} parent=5 // pred_check
        %p357 = pneg %p356
      $region42: #{tpu_custom_call.1} parent=5 // pred_check_branch
        %359 = sbr.rel (%p357) target = $region44
      $region43: #{tpu_custom_call.1} parent=5 // pred_region
        %s360 = ssub.s32 %s15, 2
        // Predicated region
        $region45: #{tpu_custom_call.1} parent=43 // pred_check
          %p361 = pneg %p128
        $region46: #{tpu_custom_call.1} parent=43 // pred_check_branch
          %363 = sbr.rel (%p361) target = $region48
        $region47: #{tpu_custom_call.1} parent=43 // pred_region
          %s364 = sand.u32 %s113, 1
          %s365 = scalar_lea.sflag [#allocation4], %s364
          %s366 = sand.u32 %s113, 1
          %s367 = smul.addr %s366, 8
          %s368 = scalar_lea.vmem [#allocation5], %s367
          %369 = dma.done %s365, 128
        $region48: #{tpu_custom_call.1} parent=43 // pred_fallthru
          _
      $region44: #{tpu_custom_call.1} parent=5 // pred_fallthru
        _
    $region6: #{tpu_custom_call.1} parent=1 // loop_footer
      %s19 = sadd.s32 1, %s15
    $region7: #{tpu_custom_call.1} parent=1 // loop_footer_branch
      %14 = sbr.rel target = $region3
    $region8: #{tpu_custom_call.1} parent=1 // loop_exit
      _
    %370 = vsyncpa [#allocation3], 1
    %s371 = scalar_lea.sflag [#allocation3], 1
    %372 = vsyncpa %s371, 1
    %373 = vsyncpa [#allocation4], 1
    %s374 = scalar_lea.sflag [#allocation4], 1
    %375 = vsyncpa %s374, 1

</llo_original>
